<compile_context>
chip_gen: v7x
topology: tpu7x:2x2x1
jax: 0.10.0
libtpu: 0.0.40
codegen_flags: <defaults>
</compile_context>

<pallas_src>
import jax
import jax.numpy as jnp
from jax.experimental import pallas as pl
from jax.experimental.pallas import tpu as pltpu

LANE = 128          # TPU lane width (last-dim tiling unit); batch now lives on lanes
MAX_TILE_B = 2048   # batch lanes per grid step for large batches


def _cdiv(a, b):
    return -(-a // b)


def _round_up(x, m):
    return ((x + m - 1) // m) * m


def qnet_kernel(xT_ref, w1_ref, b1_ref, w2_ref, b2_ref, w3_ref, b3_ref, oT_ref):
    # All activations are feature-major: (features, tile_b).  Weights are PyTorch
    # layout [out, in], biases are (out, 1) columns (lane-broadcast adds).

    # ---- Layer 1: K = state_dim (4) -> an MXU pass would be >96% padding.
    # Do it as `state_dim` VPU broadcast-FMAs (static unroll); the broadcast column is the
    # (H, 1) weight slice (cheap), the (1, tile_b) activation row broadcasts over sublanes.
    xT = xT_ref[...]                       # (state_dim, tile_b)
    w1 = w1_ref[...]                       # (H, state_dim)
    h1 = b1_ref[...]                       # (H, 1) -- broadcasts on first add
    for k in range(xT_ref.shape[0]):       # tiny, static unroll
        h1 = h1 + w1[:, k:k + 1] * xT[k:k + 1, :]
    h1 = jnp.maximum(h1, 0.0)              # (H, tile_b)

    # ---- Layers 2-3 on the MXU: (64,64)@(64,tile_b) -> N = tile_b fills the array.
    h2 = jnp.dot(w2_ref[...], h1, preferred_element_type=jnp.float32) + b2_ref[...]
    h2 = jnp.maximum(h2, 0.0)              # (H, tile_b)
    out = jnp.dot(w3_ref[...], h2, preferred_element_type=jnp.float32) + b3_ref[...]
    oT_ref[...] = out.astype(oT_ref.dtype)  # (action_dim, tile_b) -- no 128-col padding


def qnetwork_forward(state, params):
    """state: [B, state_dim] float32.
    params: dict of w1,b1,w2,b2,w3,b3 with PyTorch layout (w: [out, in], b: [out, 1]).
    Returns [B, action_dim] Q-values (matches torch forward)."""
    w1, b1, w2, b2, w3, b3 = (params["w1"], params["b1"], params["w2"],
                              params["b2"], params["w3"], params["b3"])
    B, state_dim = state.shape
    hidden = w1.shape[0]
    action_dim = w3.shape[0]

    # Batch-on-lanes: feature-major activations.  (tiny transpose, 16 B/row)
    xT = state.T                                          # (state_dim, B)

    # Tail-aware tiling; keep tile_b a multiple of the 128-lane unit.
    num_tiles = _cdiv(B, MAX_TILE_B)
    if B > LANE and num_tiles % 2 == 1:
        num_tiles += 1            # v7x: even number of grid steps -> both TCs busy
    tile_b = _round_up(_cdiv(B, num_tiles), LANE)
    b_pad = num_tiles * tile_b
    if b_pad != B:
        xT = jnp.pad(xT, ((0, 0), (0, b_pad - B)))

    const = lambda i: (0, 0)  # weights/biases stay VMEM-resident (block index never changes)
    outT = pl.pallas_call(
        qnet_kernel,
        out_shape=jax.ShapeDtypeStruct((action_dim, b_pad), jnp.float32),
        grid_spec=pltpu.PrefetchScalarGridSpec(
            num_scalar_prefetch=0,
            grid=(num_tiles,),
            in_specs=[
                pl.BlockSpec((state_dim, tile_b), lambda i: (0, i)),   # xT: streamed
                pl.BlockSpec((hidden, state_dim), const),              # w1: resident
                pl.BlockSpec((hidden, 1), const),                      # b1
                pl.BlockSpec((hidden, hidden), const),                 # w2
                pl.BlockSpec((hidden, 1), const),                      # b2
                pl.BlockSpec((action_dim, hidden), const),             # w3
                pl.BlockSpec((action_dim, 1), const),                  # b3
            ],
            out_specs=pl.BlockSpec((action_dim, tile_b), lambda i: (0, i)),
        ),
        compiler_params=pltpu.CompilerParams(
            dimension_semantics=("parallel",)),   # v7x: shard batch grid over both TCs
    )(xT, w1, b1, w2, b2, w3, b3)

    # Strip batch padding and return batch-major Q-values (tiny: action_dim*B floats).
    return outT[:, :B].T


def init_params(key, state_dim, action_dim, hidden=64):
    """Deterministic init mimicking nn.Linear's uniform(-1/sqrt(fan_in), 1/sqrt(fan_in)).
    Weights stored in PyTorch layout [out, in]; biases as [out, 1] columns."""
    ks = jax.random.split(key, 6)

    def lin(kw, kb, fan_in, fan_out):
        bound = 1.0 / jnp.sqrt(jnp.float32(fan_in))
        w = jax.random.uniform(kw, (fan_out, fan_in), jnp.float32, -bound, bound)
        b = jax.random.uniform(kb, (fan_out, 1), jnp.float32, -bound, bound)
        return w, b

    w1, b1 = lin(ks[0], ks[1], state_dim, hidden)
    w2, b2 = lin(ks[2], ks[3], hidden, hidden)
    w3, b3 = lin(ks[4], ks[5], hidden, action_dim)
    return {"w1": w1, "b1": b1, "w2": w2, "b2": b2, "w3": w3, "b3": b3}


def qnetwork_ref(state, params):
    hi = jax.lax.Precision.HIGHEST
    h1 = jnp.maximum(jnp.dot(state, params["w1"].T, precision=hi) + params["b1"].T, 0.0)
    h2 = jnp.maximum(jnp.dot(h1, params["w2"].T, precision=hi) + params["b2"].T, 0.0)
    return jnp.dot(h2, params["w3"].T, precision=hi) + params["b3"].T


if __name__ == "__main__":
    key = jax.random.PRNGKey(0)
    state_dim, action_dim, batch = 4, 2, 8  # CartPole-v1 dims, small replay mini-batch
    k_params, k_state = jax.random.split(key)
    params = init_params(k_params, state_dim, action_dim)
    state = jax.random.normal(k_state, (batch, state_dim), jnp.float32)

    fwd = jax.jit(qnetwork_forward)
    out = jax.block_until_ready(fwd(state, params))

    ref = qnetwork_ref(state, params)
    assert out.shape == (batch, action_dim)
    assert jnp.allclose(out, ref, atol=1e-4, rtol=1e-4)

    # Multi-tile / ragged-batch path (grid=(2,), padded lanes sliced off).
    big_state = jax.random.normal(jax.random.PRNGKey(1), (1234, state_dim), jnp.float32)
    big_out = jax.block_until_ready(fwd(big_state, params))
    big_ref = qnetwork_ref(big_state, params)
    assert big_out.shape == (1234, action_dim)
    assert jnp.allclose(big_out, big_ref, atol=1e-4, rtol=1e-4)

    # Large-batch path (multiple MAX_TILE_B tiles, even grid).
    huge_state = jax.random.normal(jax.random.PRNGKey(2), (5000, state_dim), jnp.float32)
    huge_out = jax.block_until_ready(fwd(huge_state, params))
    huge_ref = qnetwork_ref(huge_state, params)
    assert huge_out.shape == (5000, action_dim)
    assert jnp.allclose(huge_out, huge_ref, atol=1e-4, rtol=1e-4)

    print("KERNEL_OK")
</pallas_src>

<mosaic_0001>
module attributes {stable_mosaic.version = 11 : i64} {
  func.func @qnet_kernel(%arg0: i32, %arg1: memref<4x128xf32, #tpu.memory_space<vmem>>, %arg2: memref<64x4xf32, #tpu.memory_space<vmem>>, %arg3: memref<64x1xf32, #tpu.memory_space<vmem>>, %arg4: memref<64x64xf32, #tpu.memory_space<vmem>>, %arg5: memref<64x1xf32, #tpu.memory_space<vmem>>, %arg6: memref<2x64xf32, #tpu.memory_space<vmem>>, %arg7: memref<2x1xf32, #tpu.memory_space<vmem>>, %arg8: memref<2x128xf32, #tpu.memory_space<vmem>>) attributes {dimension_semantics = [#tpu.dimension_semantics<parallel>], iteration_bounds = array<i64: 1>, scalar_prefetch = 0 : i64, scratch_operands = 0 : i64, tpu.core_type = #tpu.core_type<tc>, window_params = [{transform_indices = @transform_0, window_bounds = array<i64: 4, 128>}, {pipeline_mode = #tpu.pipeline_mode<synchronous>, transform_indices = @transform_1, window_bounds = array<i64: 64, 4>}, {pipeline_mode = #tpu.pipeline_mode<synchronous>, transform_indices = @transform_2, window_bounds = array<i64: 64, 1>}, {pipeline_mode = #tpu.pipeline_mode<synchronous>, transform_indices = @transform_3, window_bounds = array<i64: 64, 64>}, {pipeline_mode = #tpu.pipeline_mode<synchronous>, transform_indices = @transform_4, window_bounds = array<i64: 64, 1>}, {pipeline_mode = #tpu.pipeline_mode<synchronous>, transform_indices = @transform_5, window_bounds = array<i64: 2, 64>}, {pipeline_mode = #tpu.pipeline_mode<synchronous>, transform_indices = @transform_6, window_bounds = array<i64: 2, 1>}, {transform_indices = @transform_7, window_bounds = array<i64: 2, 128>}]} {
    %c0 = arith.constant 0 : index
    %c0_0 = arith.constant 0 : index
    %0 = vector.load %arg1[%c0, %c0_0] : memref<4x128xf32, #tpu.memory_space<vmem>>, vector<4x128xf32>
    %c0_1 = arith.constant 0 : index
    %c0_2 = arith.constant 0 : index
    %1 = vector.load %arg2[%c0_1, %c0_2] : memref<64x4xf32, #tpu.memory_space<vmem>>, vector<64x4xf32>
    %c0_3 = arith.constant 0 : index
    %c0_4 = arith.constant 0 : index
    %2 = vector.load %arg3[%c0_3, %c0_4] : memref<64x1xf32, #tpu.memory_space<vmem>>, vector<64x1xf32>
    %3 = vector.extract_strided_slice %1 {offsets = [0, 0], sizes = [64, 1], strides = [1, 1]} : vector<64x4xf32> to vector<64x1xf32>
    %4 = vector.extract_strided_slice %0 {offsets = [0, 0], sizes = [1, 128], strides = [1, 1]} : vector<4x128xf32> to vector<1x128xf32>
    %5 = vector.broadcast %3 : vector<64x1xf32> to vector<64x128xf32>
    %6 = vector.broadcast %4 : vector<1x128xf32> to vector<64x128xf32>
    %7 = arith.mulf %5, %6 : vector<64x128xf32>
    %8 = vector.broadcast %2 : vector<64x1xf32> to vector<64x128xf32>
    %9 = arith.addf %8, %7 : vector<64x128xf32>
    %10 = vector.extract_strided_slice %1 {offsets = [0, 1], sizes = [64, 1], strides = [1, 1]} : vector<64x4xf32> to vector<64x1xf32>
    %11 = vector.extract_strided_slice %0 {offsets = [1, 0], sizes = [1, 128], strides = [1, 1]} : vector<4x128xf32> to vector<1x128xf32>
    %12 = vector.broadcast %10 : vector<64x1xf32> to vector<64x128xf32>
    %13 = vector.broadcast %11 : vector<1x128xf32> to vector<64x128xf32>
    %14 = arith.mulf %12, %13 : vector<64x128xf32>
    %15 = arith.addf %9, %14 : vector<64x128xf32>
    %16 = vector.extract_strided_slice %1 {offsets = [0, 2], sizes = [64, 1], strides = [1, 1]} : vector<64x4xf32> to vector<64x1xf32>
    %17 = vector.extract_strided_slice %0 {offsets = [2, 0], sizes = [1, 128], strides = [1, 1]} : vector<4x128xf32> to vector<1x128xf32>
    %18 = vector.broadcast %16 : vector<64x1xf32> to vector<64x128xf32>
    %19 = vector.broadcast %17 : vector<1x128xf32> to vector<64x128xf32>
    %20 = arith.mulf %18, %19 : vector<64x128xf32>
    %21 = arith.addf %15, %20 : vector<64x128xf32>
    %22 = vector.extract_strided_slice %1 {offsets = [0, 3], sizes = [64, 1], strides = [1, 1]} : vector<64x4xf32> to vector<64x1xf32>
    %23 = vector.extract_strided_slice %0 {offsets = [3, 0], sizes = [1, 128], strides = [1, 1]} : vector<4x128xf32> to vector<1x128xf32>
    %24 = vector.broadcast %22 : vector<64x1xf32> to vector<64x128xf32>
    %25 = vector.broadcast %23 : vector<1x128xf32> to vector<64x128xf32>
    %26 = arith.mulf %24, %25 : vector<64x128xf32>
    %27 = arith.addf %21, %26 : vector<64x128xf32>
    %cst = arith.constant 0.000000e+00 : f32
    %28 = vector.broadcast %cst : f32 to vector<64x128xf32>
    %29 = arith.maximumf %27, %28 : vector<64x128xf32>
    %c0_5 = arith.constant 0 : index
    %c0_6 = arith.constant 0 : index
    %30 = vector.load %arg4[%c0_5, %c0_6] : memref<64x64xf32, #tpu.memory_space<vmem>>, vector<64x64xf32>
    %cst_7 = arith.constant dense<0.000000e+00> : vector<64x128xf32>
    %31 = tpu.matmul %30, %29, %cst_7 {dimension_numbers = #tpu.dot_dimension_numbers<[1], [0], [0], [1], [0, 0, 1, 1], [], []>} : vector<64x64xf32>, vector<64x128xf32>, vector<64x128xf32> -> vector<64x128xf32>
    %c0_8 = arith.constant 0 : index
    %c0_9 = arith.constant 0 : index
    %32 = vector.load %arg5[%c0_8, %c0_9] : memref<64x1xf32, #tpu.memory_space<vmem>>, vector<64x1xf32>
    %33 = vector.broadcast %32 : vector<64x1xf32> to vector<64x128xf32>
    %34 = arith.addf %31, %33 : vector<64x128xf32>
    %cst_10 = arith.constant 0.000000e+00 : f32
    %35 = vector.broadcast %cst_10 : f32 to vector<64x128xf32>
    %36 = arith.maximumf %34, %35 : vector<64x128xf32>
    %c0_11 = arith.constant 0 : index
    %c0_12 = arith.constant 0 : index
    %37 = vector.load %arg6[%c0_11, %c0_12] : memref<2x64xf32, #tpu.memory_space<vmem>>, vector<2x64xf32>
    %cst_13 = arith.constant dense<0.000000e+00> : vector<2x128xf32>
    %38 = tpu.matmul %37, %36, %cst_13 {dimension_numbers = #tpu.dot_dimension_numbers<[1], [0], [0], [1], [0, 0, 1, 1], [], []>} : vector<2x64xf32>, vector<64x128xf32>, vector<2x128xf32> -> vector<2x128xf32>
    %c0_14 = arith.constant 0 : index
    %c0_15 = arith.constant 0 : index
    %39 = vector.load %arg7[%c0_14, %c0_15] : memref<2x1xf32, #tpu.memory_space<vmem>>, vector<2x1xf32>
    %40 = vector.broadcast %39 : vector<2x1xf32> to vector<2x128xf32>
    %41 = arith.addf %38, %40 : vector<2x128xf32>
    %c0_16 = arith.constant 0 : index
    %c0_17 = arith.constant 0 : index
    %42 = vector.load %arg8[%c0_16, %c0_17] : memref<2x128xf32, #tpu.memory_space<vmem>>, vector<2x128xf32>
    tpu.vector_store %arg8[%c0_16, %c0_17], %41 {strides = array<i32>} : memref<2x128xf32, #tpu.memory_space<vmem>>, vector<2x128xf32>,
    return
  }
  func.func @transform_0(%arg0: i32) -> (i32, i32) {
    %c0_i32 = arith.constant 0 : i32
    %c0_i32_0 = arith.constant 0 : i32
    return %c0_i32, %arg0 : i32, i32
  }
  func.func @transform_1(%arg0: i32) -> (i32, i32) {
    %c0_i32 = arith.constant 0 : i32
    %c0_i32_0 = arith.constant 0 : i32
    %c0_i32_1 = arith.constant 0 : i32
    return %c0_i32, %c0_i32_0 : i32, i32
  }
  func.func @transform_2(%arg0: i32) -> (i32, i32) {
    %c0_i32 = arith.constant 0 : i32
    %c0_i32_0 = arith.constant 0 : i32
    %c0_i32_1 = arith.constant 0 : i32
    return %c0_i32, %c0_i32_0 : i32, i32
  }
  func.func @transform_3(%arg0: i32) -> (i32, i32) {
    %c0_i32 = arith.constant 0 : i32
    %c0_i32_0 = arith.constant 0 : i32
    %c0_i32_1 = arith.constant 0 : i32
    return %c0_i32, %c0_i32_0 : i32, i32
  }
  func.func @transform_4(%arg0: i32) -> (i32, i32) {
    %c0_i32 = arith.constant 0 : i32
    %c0_i32_0 = arith.constant 0 : i32
    %c0_i32_1 = arith.constant 0 : i32
    return %c0_i32, %c0_i32_0 : i32, i32
  }
  func.func @transform_5(%arg0: i32) -> (i32, i32) {
    %c0_i32 = arith.constant 0 : i32
    %c0_i32_0 = arith.constant 0 : i32
    %c0_i32_1 = arith.constant 0 : i32
    return %c0_i32, %c0_i32_0 : i32, i32
  }
  func.func @transform_6(%arg0: i32) -> (i32, i32) {
    %c0_i32 = arith.constant 0 : i32
    %c0_i32_0 = arith.constant 0 : i32
    %c0_i32_1 = arith.constant 0 : i32
    return %c0_i32, %c0_i32_0 : i32, i32
  }
  func.func @transform_7(%arg0: i32) -> (i32, i32) {
    %c0_i32 = arith.constant 0 : i32
    %c0_i32_0 = arith.constant 0 : i32
    return %c0_i32, %arg0 : i32, i32
  }
}

</mosaic_0001>

<llo_original>
// kernel: qnetwork_forward.1
$region0: #{qnetwork_forward.1}
  #allocation0 [shape = 'u32[]', space=smem, size = 0x4, offset = 0x4, fixed_abs, tag = 'smem constant byte address 0x4 - core index']
  #allocation1 [shape = 'u32[144,128]{1,0:T(1,128)}', space=vmem, size = 0x12000, scoped, tag = 'internal scratch']
  %s0 = inlined_call_operand.vmem [shape: f32[4,128], index: 0, kind: input, shape index: {}]
  %s1 = inlined_call_operand.vmem [shape: f32[64,4], index: 1, kind: input, shape index: {}]
  %s2 = inlined_call_operand.vmem [shape: f32[64,1], index: 2, kind: input, shape index: {}]
  %s3 = inlined_call_operand.vmem [shape: f32[64,64], index: 3, kind: input, shape index: {}]
  %s4 = inlined_call_operand.vmem [shape: f32[64,1], index: 4, kind: input, shape index: {}]
  %s5 = inlined_call_operand.vmem [shape: f32[2,64], index: 5, kind: input, shape index: {}]
  %s6 = inlined_call_operand.vmem [shape: f32[2,1], index: 6, kind: input, shape index: {}]
  %s7 = inlined_call_operand.vmem [shape: f32[2,128], index: 7, kind: output, shape index: {}]
  %s8 = sld [smem:[#allocation0]]
  $region38: #{qnetwork_forward.1} parent=0
    _
  %s10 = ssub.s32 1, %s8
  %s11 = scalar_select 0, %s10, %s8
  // Predicated region
  $region2: #{qnetwork_forward.1} parent=0 // pred_check
    _
  $region3: #{qnetwork_forward.1} parent=0 // pred_check_branch
    %13 = sbr.rel (0) target = $region5
  $region4: #{qnetwork_forward.1} parent=0 // pred_region
    _
  $region5: #{qnetwork_forward.1} parent=0 // pred_fallthru
    _
  // Predicated region
  $region6: #{qnetwork_forward.1} parent=0 // pred_check
    _
  $region7: #{qnetwork_forward.1} parent=0 // pred_check_branch
    %15 = sbr.rel (0) target = $region9
  $region8: #{qnetwork_forward.1} parent=0 // pred_region
    _
  $region9: #{qnetwork_forward.1} parent=0 // pred_fallthru
    _
  // Predicated region
  $region10: #{qnetwork_forward.1} parent=0 // pred_check
    _
  $region11: #{qnetwork_forward.1} parent=0 // pred_check_branch
    %17 = sbr.rel (0) target = $region13
  $region12: #{qnetwork_forward.1} parent=0 // pred_region
    _
  $region13: #{qnetwork_forward.1} parent=0 // pred_fallthru
    _
  // Predicated region
  $region14: #{qnetwork_forward.1} parent=0 // pred_check
    _
  $region15: #{qnetwork_forward.1} parent=0 // pred_check_branch
    %19 = sbr.rel (0) target = $region17
  $region16: #{qnetwork_forward.1} parent=0 // pred_region
    _
  $region17: #{qnetwork_forward.1} parent=0 // pred_fallthru
    _
  // Predicated region
  $region18: #{qnetwork_forward.1} parent=0 // pred_check
    _
  $region19: #{qnetwork_forward.1} parent=0 // pred_check_branch
    %21 = sbr.rel (0) target = $region21
  $region20: #{qnetwork_forward.1} parent=0 // pred_region
    _
  $region21: #{qnetwork_forward.1} parent=0 // pred_fallthru
    _
  // Predicated region
  $region22: #{qnetwork_forward.1} parent=0 // pred_check
    _
  $region23: #{qnetwork_forward.1} parent=0 // pred_check_branch
    %23 = sbr.rel (0) target = $region25
  $region24: #{qnetwork_forward.1} parent=0 // pred_region
    _
  $region25: #{qnetwork_forward.1} parent=0 // pred_fallthru
    _
  // Predicated region
  $region26: #{qnetwork_forward.1} parent=0 // pred_check
    _
  $region27: #{qnetwork_forward.1} parent=0 // pred_check_branch
    %25 = sbr.rel (0) target = $region29
  $region28: #{qnetwork_forward.1} parent=0 // pred_region
    _
  $region29: #{qnetwork_forward.1} parent=0 // pred_fallthru
    _
  %v26 = vld [vmem:[%s0] sm:$0xf]
  %v27 = vld [vmem:[%s1] sm:$0xff]
  %v28 = vld [vmem:[%s1 + $0x8] sm:$0xff]
  %v29 = vld [vmem:[%s1 + $0x10] sm:$0xff]
  %v30 = vld [vmem:[%s1 + $0x18] sm:$0xff]
  %v31 = vld [vmem:[%s1 + $0x20] sm:$0xff]
  %v32 = vld [vmem:[%s1 + $0x28] sm:$0xff]
  %v33 = vld [vmem:[%s1 + $0x30] sm:$0xff]
  %v34 = vld [vmem:[%s1 + $0x38] sm:$0xff]
  %v35 = vld [vmem:[%s2] sm:$0xff]
  %v36 = vld [vmem:[%s2 + $0x8] sm:$0xff]
  %v37 = vld [vmem:[%s2 + $0x10] sm:$0xff]
  %v38 = vld [vmem:[%s2 + $0x18] sm:$0xff]
  %v39 = vld [vmem:[%s2 + $0x20] sm:$0xff]
  %v40 = vld [vmem:[%s2 + $0x28] sm:$0xff]
  %v41 = vld [vmem:[%s2 + $0x30] sm:$0xff]
  %v42 = vld [vmem:[%s2 + $0x38] sm:$0xff]
  %44 = vset.pattern.permute.xlu0 0
  %45 = vperm.xlu0 %44, %v27
  %v46 = vpop.permute.xlu0 %45
  %49 = vset.pattern.permute.xlu0 0
  %50 = vperm.xlu0 %49, %v28
  %v51 = vpop.permute.xlu0 %50
  %54 = vset.pattern.permute.xlu0 0
  %55 = vperm.xlu0 %54, %v29
  %v56 = vpop.permute.xlu0 %55
  %59 = vset.pattern.permute.xlu0 0
  %60 = vperm.xlu0 %59, %v30
  %v61 = vpop.permute.xlu0 %60
  %64 = vset.pattern.permute.xlu0 0
  %65 = vperm.xlu0 %64, %v31
  %v66 = vpop.permute.xlu0 %65
  %69 = vset.pattern.permute.xlu0 0
  %70 = vperm.xlu0 %69, %v32
  %v71 = vpop.permute.xlu0 %70
  %74 = vset.pattern.permute.xlu0 0
  %75 = vperm.xlu0 %74, %v33
  %v76 = vpop.permute.xlu0 %75
  %79 = vset.pattern.permute.xlu0 0
  %80 = vperm.xlu0 %79, %v34
  %v81 = vpop.permute.xlu0 %80
  %v83 = vlaneseq
  %v84 = vshrl.u32 %v83, 7
  %v85 = vsub.s32 0, %v84
  %v86 = vrot.slane %v26, %v85
  %v87 = vmul.f32 %v46, %v86
  %v88 = vmul.f32 %v51, %v86
  %v89 = vmul.f32 %v56, %v86
  %v90 = vmul.f32 %v61, %v86
  %v91 = vmul.f32 %v66, %v86
  %v92 = vmul.f32 %v71, %v86
  %v93 = vmul.f32 %v76, %v86
  %v94 = vmul.f32 %v81, %v86
  %96 = vset.pattern.permute.xlu0 0
  %97 = vperm.xlu0 %96, %v35
  %v98 = vpop.permute.xlu0 %97
  %101 = vset.pattern.permute.xlu0 0
  %102 = vperm.xlu0 %101, %v36
  %v103 = vpop.permute.xlu0 %102
  %106 = vset.pattern.permute.xlu0 0
  %107 = vperm.xlu0 %106, %v37
  %v108 = vpop.permute.xlu0 %107
  %111 = vset.pattern.permute.xlu0 0
  %112 = vperm.xlu0 %111, %v38
  %v113 = vpop.permute.xlu0 %112
  %116 = vset.pattern.permute.xlu0 0
  %117 = vperm.xlu0 %116, %v39
  %v118 = vpop.permute.xlu0 %117
  %121 = vset.pattern.permute.xlu0 0
  %122 = vperm.xlu0 %121, %v40
  %v123 = vpop.permute.xlu0 %122
  %126 = vset.pattern.permute.xlu0 0
  %127 = vperm.xlu0 %126, %v41
  %v128 = vpop.permute.xlu0 %127
  %131 = vset.pattern.permute.xlu0 0
  %132 = vperm.xlu0 %131, %v42
  %v133 = vpop.permute.xlu0 %132
  %v135 = vadd.f32 %v98, %v87
  %v136 = vadd.f32 %v103, %v88
  %v137 = vadd.f32 %v108, %v89
  %v138 = vadd.f32 %v113, %v90
  %v139 = vadd.f32 %v118, %v91
  %v140 = vadd.f32 %v123, %v92
  %v141 = vadd.f32 %v128, %v93
  %v142 = vadd.f32 %v133, %v94
  %143 = vset.pattern.permute.xlu0 1
  %144 = vperm.xlu0 %143, %v27
  %v145 = vpop.permute.xlu0 %144
  %147 = vset.pattern.permute.xlu0 1
  %148 = vperm.xlu0 %147, %v28
  %v149 = vpop.permute.xlu0 %148
  %151 = vset.pattern.permute.xlu0 1
  %152 = vperm.xlu0 %151, %v29
  %v153 = vpop.permute.xlu0 %152
  %155 = vset.pattern.permute.xlu0 1
  %156 = vperm.xlu0 %155, %v30
  %v157 = vpop.permute.xlu0 %156
  %159 = vset.pattern.permute.xlu0 1
  %160 = vperm.xlu0 %159, %v31
  %v161 = vpop.permute.xlu0 %160
  %163 = vset.pattern.permute.xlu0 1
  %164 = vperm.xlu0 %163, %v32
  %v165 = vpop.permute.xlu0 %164
  %167 = vset.pattern.permute.xlu0 1
  %168 = vperm.xlu0 %167, %v33
  %v169 = vpop.permute.xlu0 %168
  %171 = vset.pattern.permute.xlu0 1
  %172 = vperm.xlu0 %171, %v34
  %v173 = vpop.permute.xlu0 %172
  %v175 = vlaneseq
  %v176 = vshrl.u32 %v175, 7
  %v177 = vsub.s32 1, %v176
  %v178 = vrot.slane %v26, %v177
  %v179 = vmul.f32 %v145, %v178
  %v180 = vmul.f32 %v149, %v178
  %v181 = vmul.f32 %v153, %v178
  %v182 = vmul.f32 %v157, %v178
  %v183 = vmul.f32 %v161, %v178
  %v184 = vmul.f32 %v165, %v178
  %v185 = vmul.f32 %v169, %v178
  %v186 = vmul.f32 %v173, %v178
  %v187 = vadd.f32 %v135, %v179
  %v188 = vadd.f32 %v136, %v180
  %v189 = vadd.f32 %v137, %v181
  %v190 = vadd.f32 %v138, %v182
  %v191 = vadd.f32 %v139, %v183
  %v192 = vadd.f32 %v140, %v184
  %v193 = vadd.f32 %v141, %v185
  %v194 = vadd.f32 %v142, %v186
  %195 = vset.pattern.permute.xlu0 2
  %196 = vperm.xlu0 %195, %v27
  %v197 = vpop.permute.xlu0 %196
  %199 = vset.pattern.permute.xlu0 2
  %200 = vperm.xlu0 %199, %v28
  %v201 = vpop.permute.xlu0 %200
  %203 = vset.pattern.permute.xlu0 2
  %204 = vperm.xlu0 %203, %v29
  %v205 = vpop.permute.xlu0 %204
  %207 = vset.pattern.permute.xlu0 2
  %208 = vperm.xlu0 %207, %v30
  %v209 = vpop.permute.xlu0 %208
  %211 = vset.pattern.permute.xlu0 2
  %212 = vperm.xlu0 %211, %v31
  %v213 = vpop.permute.xlu0 %212
  %215 = vset.pattern.permute.xlu0 2
  %216 = vperm.xlu0 %215, %v32
  %v217 = vpop.permute.xlu0 %216
  %219 = vset.pattern.permute.xlu0 2
  %220 = vperm.xlu0 %219, %v33
  %v221 = vpop.permute.xlu0 %220
  %223 = vset.pattern.permute.xlu0 2
  %224 = vperm.xlu0 %223, %v34
  %v225 = vpop.permute.xlu0 %224
  %v227 = vlaneseq
  %v228 = vshrl.u32 %v227, 7
  %v229 = vsub.s32 2, %v228
  %v230 = vrot.slane %v26, %v229
  %v231 = vmul.f32 %v197, %v230
  %v232 = vmul.f32 %v201, %v230
  %v233 = vmul.f32 %v205, %v230
  %v234 = vmul.f32 %v209, %v230
  %v235 = vmul.f32 %v213, %v230
  %v236 = vmul.f32 %v217, %v230
  %v237 = vmul.f32 %v221, %v230
  %v238 = vmul.f32 %v225, %v230
  %v239 = vadd.f32 %v187, %v231
  %v240 = vadd.f32 %v188, %v232
  %v241 = vadd.f32 %v189, %v233
  %v242 = vadd.f32 %v190, %v234
  %v243 = vadd.f32 %v191, %v235
  %v244 = vadd.f32 %v192, %v236
  %v245 = vadd.f32 %v193, %v237
  %v246 = vadd.f32 %v194, %v238
  %247 = vset.pattern.permute.xlu0 3
  %248 = vperm.xlu0 %247, %v27
  %v249 = vpop.permute.xlu0 %248
  %251 = vset.pattern.permute.xlu0 3
  %252 = vperm.xlu0 %251, %v28
  %v253 = vpop.permute.xlu0 %252
  %255 = vset.pattern.permute.xlu0 3
  %256 = vperm.xlu0 %255, %v29
  %v257 = vpop.permute.xlu0 %256
  %259 = vset.pattern.permute.xlu0 3
  %260 = vperm.xlu0 %259, %v30
  %v261 = vpop.permute.xlu0 %260
  %263 = vset.pattern.permute.xlu0 3
  %264 = vperm.xlu0 %263, %v31
  %v265 = vpop.permute.xlu0 %264
  %267 = vset.pattern.permute.xlu0 3
  %268 = vperm.xlu0 %267, %v32
  %v269 = vpop.permute.xlu0 %268
  %271 = vset.pattern.permute.xlu0 3
  %272 = vperm.xlu0 %271, %v33
  %v273 = vpop.permute.xlu0 %272
  %275 = vset.pattern.permute.xlu0 3
  %276 = vperm.xlu0 %275, %v34
  %v277 = vpop.permute.xlu0 %276
  %v279 = vlaneseq
  %v280 = vshrl.u32 %v279, 7
  %v281 = vsub.s32 3, %v280
  %v282 = vrot.slane %v26, %v281
  %v283 = vmul.f32 %v249, %v282
  %v284 = vmul.f32 %v253, %v282
  %v285 = vmul.f32 %v257, %v282
  %v286 = vmul.f32 %v261, %v282
  %v287 = vmul.f32 %v265, %v282
  %v288 = vmul.f32 %v269, %v282
  %v289 = vmul.f32 %v273, %v282
  %v290 = vmul.f32 %v277, %v282
  %v291 = vadd.f32 %v239, %v283
  %v292 = vadd.f32 %v240, %v284
  %v293 = vadd.f32 %v241, %v285
  %v294 = vadd.f32 %v242, %v286
  %v295 = vadd.f32 %v243, %v287
  %v296 = vadd.f32 %v244, %v288
  %v297 = vadd.f32 %v245, %v289
  %v298 = vadd.f32 %v246, %v290
  %v299 = vmax.f32 %v291, 0.0
  %v300 = vmax.f32 %v292, 0.0
  %v301 = vmax.f32 %v293, 0.0
  %v302 = vmax.f32 %v294, 0.0
  %v303 = vmax.f32 %v295, 0.0
  %v304 = vmax.f32 %v296, 0.0
  %v305 = vmax.f32 %v297, 0.0
  %v306 = vmax.f32 %v298, 0.0
  %v307 = vld [vmem:[%s3] sm:$0xff]
  %v308 = vld [vmem:[%s3 + $0x8] sm:$0xff]
  %v309 = vld [vmem:[%s3 + $0x10] sm:$0xff]
  %v310 = vld [vmem:[%s3 + $0x18] sm:$0xff]
  %v311 = vld [vmem:[%s3 + $0x20] sm:$0xff]
  %v312 = vld [vmem:[%s3 + $0x28] sm:$0xff]
  %v313 = vld [vmem:[%s3 + $0x30] sm:$0xff]
  %v314 = vld [vmem:[%s3 + $0x38] sm:$0xff]
  %v315 = vld [vmem:[%s4] sm:$0xff]
  %v316 = vld [vmem:[%s4 + $0x8] sm:$0xff]
  %v317 = vld [vmem:[%s4 + $0x10] sm:$0xff]
  %v318 = vld [vmem:[%s4 + $0x18] sm:$0xff]
  %v319 = vld [vmem:[%s4 + $0x20] sm:$0xff]
  %v320 = vld [vmem:[%s4 + $0x28] sm:$0xff]
  %v321 = vld [vmem:[%s4 + $0x30] sm:$0xff]
  %v322 = vld [vmem:[%s4 + $0x38] sm:$0xff]
  %324 = vset.pattern.permute.xlu0 0
  %325 = vperm.xlu0 %324, %v315
  %v326 = vpop.permute.xlu0 %325
  %329 = vset.pattern.permute.xlu0 0
  %330 = vperm.xlu0 %329, %v316
  %v331 = vpop.permute.xlu0 %330
  %334 = vset.pattern.permute.xlu0 0
  %335 = vperm.xlu0 %334, %v317
  %v336 = vpop.permute.xlu0 %335
  %339 = vset.pattern.permute.xlu0 0
  %340 = vperm.xlu0 %339, %v318
  %v341 = vpop.permute.xlu0 %340
  %344 = vset.pattern.permute.xlu0 0
  %345 = vperm.xlu0 %344, %v319
  %v346 = vpop.permute.xlu0 %345
  %349 = vset.pattern.permute.xlu0 0
  %350 = vperm.xlu0 %349, %v320
  %v351 = vpop.permute.xlu0 %350
  %354 = vset.pattern.permute.xlu0 0
  %355 = vperm.xlu0 %354, %v321
  %v356 = vpop.permute.xlu0 %355
  %359 = vset.pattern.permute.xlu0 0
  %360 = vperm.xlu0 %359, %v322
  %v361 = vpop.permute.xlu0 %360
  %vm363 = vcmask 523264
  %v365 = vsel %vm363, %v307, 0
  %v368 = vsel %vm363, %v308, 0
  %v371 = vsel %vm363, %v309, 0
  %v374 = vsel %vm363, %v310, 0
  %v377 = vsel %vm363, %v311, 0
  %v380 = vsel %vm363, %v312, 0
  %v383 = vsel %vm363, %v313, 0
  %v386 = vsel %vm363, %v314, 0
  %388 = vmatprep.subr.mxu0 0.0
  %389 = vmatpush1.msra.mxu0 %v299
  %390 = vmatprep.subr.mxu0 0.0
  %391 = vmatpush1.msra.mxu0 %v300
  %392 = vmatprep.subr.mxu0 0.0
  %393 = vmatpush1.msra.mxu0 %v301
  %394 = vmatprep.subr.mxu0 0.0
  %395 = vmatpush1.msra.mxu0 %v302
  %396 = vmatprep.subr.mxu0 0.0
  %397 = vmatpush1.msra.mxu0 %v303
  %398 = vmatprep.subr.mxu0 0.0
  %399 = vmatpush1.msra.mxu0 %v304
  %400 = vmatprep.subr.mxu0 0.0
  %401 = vmatpush1.msra.mxu0 %v305
  %402 = vmatprep.subr.mxu0 0.0
  %403 = vmatpush1.msra.mxu0 %v306
  %404 = vmatprep.subr.mxu0 0.0
  %405 = vmatpush1.msra.mxu0 0.0
  %406 = vmatprep.subr.mxu0 0.0
  %407 = vmatpush1.msra.mxu0 0.0
  %408 = vmatprep.subr.mxu0 0.0
  %409 = vmatpush1.msra.mxu0 0.0
  %410 = vmatprep.subr.mxu0 0.0
  %411 = vmatpush1.msra.mxu0 0.0
  %412 = vmatprep.subr.mxu0 0.0
  %413 = vmatpush1.msra.mxu0 0.0
  %414 = vmatprep.subr.mxu0 0.0
  %415 = vmatpush1.msra.mxu0 0.0
  %416 = vmatprep.subr.mxu0 0.0
  %417 = vmatpush1.msra.mxu0 0.0
  %418 = vmatprep.subr.mxu0 0.0
  %419 = vmatpush1.msra.mxu0 0.0
  %420 = vmatprep.subr.mxu0 0.0
  %421 = vmatpush1.msra.mxu0 0.0
  %422 = vmatprep.subr.mxu0 0.0
  %423 = vmatpush1.msra.mxu0 0.0
  %424 = vmatprep.subr.mxu0 0.0
  %425 = vmatpush1.msra.mxu0 0.0
  %426 = vmatprep.subr.mxu0 0.0
  %427 = vmatpush1.msra.mxu0 0.0
  %428 = vmatprep.subr.mxu0 0.0
  %429 = vmatpush1.msra.mxu0 0.0
  %430 = vmatprep.subr.mxu0 0.0
  %431 = vmatpush1.msra.mxu0 0.0
  %432 = vmatprep.subr.mxu0 0.0
  %433 = vmatpush1.msra.mxu0 0.0
  %434 = vmatprep.subr.mxu0 0.0
  %435 = vmatpush1.msra.mxu0 0.0
  %436 = vmatprep.subr.mxu0 0.0
  %437 = vmatpush1.msra.mxu0 0.0
  %438 = vmatprep.subr.mxu0 0.0
  %439 = vmatpush1.msra.mxu0 0.0
  %440 = vmatprep.subr.mxu0 0.0
  %441 = vmatpush1.msra.mxu0 0.0
  %442 = vmatprep.subr.mxu0 0.0
  %443 = vmatpush1.msra.mxu0 0.0
  %444 = vmatprep.subr.mxu0 0.0
  %445 = vmatpush1.msra.mxu0 0.0
  %446 = vmatprep.subr.mxu0 0.0
  %447 = vmatpush1.msra.mxu0 0.0
  %448 = vmatprep.subr.mxu0 0.0
  %449 = vmatpush1.msra.mxu0 0.0
  %450 = vmatprep.subr.mxu0 0.0
  %451 = vmatpush1.msra.mxu0 0.0
  %452 = vmatprep.mubr.f32.mxu0 0.0
  %453 = vmatmul.mubr.f32.gmra.mrb[0].mxu0 %v365
  %v454 = vpop.f32.mrb[0].mxu0
  %v455 = vadd.f32 %v326, %v454
  %v456 = vpop.f32.mrb[0].mxu0
  %457 = vmatprep.mubr.f32.mxu0 0.0
  %458 = vmatmul.mubr.f32.gmra.mrb[0].mxu0 %v368
  %v459 = vpop.f32.mrb[0].mxu0
  %v460 = vadd.f32 %v331, %v459
  %v461 = vpop.f32.mrb[0].mxu0
  %462 = vmatprep.mubr.f32.mxu0 0.0
  %463 = vmatmul.mubr.f32.gmra.mrb[0].mxu0 %v371
  %v464 = vpop.f32.mrb[0].mxu0
  %v465 = vadd.f32 %v336, %v464
  %v466 = vpop.f32.mrb[0].mxu0
  %467 = vmatprep.mubr.f32.mxu0 0.0
  %468 = vmatmul.mubr.f32.gmra.mrb[0].mxu0 %v374
  %v469 = vpop.f32.mrb[0].mxu0
  %v470 = vadd.f32 %v341, %v469
  %v471 = vpop.f32.mrb[0].mxu0
  %472 = vmatprep.mubr.f32.mxu0 0.0
  %473 = vmatmul.mubr.f32.gmra.mrb[0].mxu0 %v377
  %v474 = vpop.f32.mrb[0].mxu0
  %v475 = vadd.f32 %v346, %v474
  %v476 = vpop.f32.mrb[0].mxu0
  %477 = vmatprep.mubr.f32.mxu0 0.0
  %478 = vmatmul.mubr.f32.gmra.mrb[0].mxu0 %v380
  %v479 = vpop.f32.mrb[0].mxu0
  %v480 = vadd.f32 %v351, %v479
  %v481 = vpop.f32.mrb[0].mxu0
  %482 = vmatprep.mubr.f32.mxu0 0.0
  %483 = vmatmul.mubr.f32.gmra.mrb[0].mxu0 %v383
  %v484 = vpop.f32.mrb[0].mxu0
  %v485 = vadd.f32 %v356, %v484
  %v486 = vpop.f32.mrb[0].mxu0
  %487 = vmatprep.mubr.f32.mxu0 0.0
  %488 = vmatmul.mubr.f32.gmra.mrb[0].mxu0 %v386
  %v489 = vpop.f32.mrb[0].mxu0
  %v490 = vadd.f32 %v361, %v489
  %v491 = vpop.f32.mrb[0].mxu0
  %492 = vdwg.mxu0
  %v493 = vmax.f32 %v455, 0.0
  %v494 = vmax.f32 %v460, 0.0
  %v495 = vmax.f32 %v465, 0.0
  %v496 = vmax.f32 %v470, 0.0
  %v497 = vmax.f32 %v475, 0.0
  %v498 = vmax.f32 %v480, 0.0
  %v499 = vmax.f32 %v485, 0.0
  %v500 = vmax.f32 %v490, 0.0
  %v501 = vld [vmem:[%s5] sm:$0x3]
  %v502 = vld [vmem:[%s6] sm:$0x3]
  %504 = vset.pattern.permute.xlu0 0
  %505 = vperm.xlu0 %504, %v502
  %v506 = vpop.permute.xlu0 %505
  %v509 = vsel %vm363, %v501, 0
  %511 = vmatprep.subr.mxu0 0.0
  %512 = vmatpush1.msra.mxu0 %v493
  %513 = vmatprep.subr.mxu0 0.0
  %514 = vmatpush1.msra.mxu0 %v494
  %515 = vmatprep.subr.mxu0 0.0
  %516 = vmatpush1.msra.mxu0 %v495
  %517 = vmatprep.subr.mxu0 0.0
  %518 = vmatpush1.msra.mxu0 %v496
  %519 = vmatprep.subr.mxu0 0.0
  %520 = vmatpush1.msra.mxu0 %v497
  %521 = vmatprep.subr.mxu0 0.0
  %522 = vmatpush1.msra.mxu0 %v498
  %523 = vmatprep.subr.mxu0 0.0
  %524 = vmatpush1.msra.mxu0 %v499
  %525 = vmatprep.subr.mxu0 0.0
  %526 = vmatpush1.msra.mxu0 %v500
  %527 = vmatprep.subr.mxu0 0.0
  %528 = vmatpush1.msra.mxu0 0.0
  %529 = vmatprep.subr.mxu0 0.0
  %530 = vmatpush1.msra.mxu0 0.0
  %531 = vmatprep.subr.mxu0 0.0
  %532 = vmatpush1.msra.mxu0 0.0
  %533 = vmatprep.subr.mxu0 0.0
  %534 = vmatpush1.msra.mxu0 0.0
  %535 = vmatprep.subr.mxu0 0.0
  %536 = vmatpush1.msra.mxu0 0.0
  %537 = vmatprep.subr.mxu0 0.0
  %538 = vmatpush1.msra.mxu0 0.0
  %539 = vmatprep.subr.mxu0 0.0
  %540 = vmatpush1.msra.mxu0 0.0
  %541 = vmatprep.subr.mxu0 0.0
  %542 = vmatpush1.msra.mxu0 0.0
  %543 = vmatprep.subr.mxu0 0.0
  %544 = vmatpush1.msra.mxu0 0.0
  %545 = vmatprep.subr.mxu0 0.0
  %546 = vmatpush1.msra.mxu0 0.0
  %547 = vmatprep.subr.mxu0 0.0
  %548 = vmatpush1.msra.mxu0 0.0
  %549 = vmatprep.subr.mxu0 0.0
  %550 = vmatpush1.msra.mxu0 0.0
  %551 = vmatprep.subr.mxu0 0.0
  %552 = vmatpush1.msra.mxu0 0.0
  %553 = vmatprep.subr.mxu0 0.0
  %554 = vmatpush1.msra.mxu0 0.0
  %555 = vmatprep.subr.mxu0 0.0
  %556 = vmatpush1.msra.mxu0 0.0
  %557 = vmatprep.subr.mxu0 0.0
  %558 = vmatpush1.msra.mxu0 0.0
  %559 = vmatprep.subr.mxu0 0.0
  %560 = vmatpush1.msra.mxu0 0.0
  %561 = vmatprep.subr.mxu0 0.0
  %562 = vmatpush1.msra.mxu0 0.0
  %563 = vmatprep.subr.mxu0 0.0
  %564 = vmatpush1.msra.mxu0 0.0
  %565 = vmatprep.subr.mxu0 0.0
  %566 = vmatpush1.msra.mxu0 0.0
  %567 = vmatprep.subr.mxu0 0.0
  %568 = vmatpush1.msra.mxu0 0.0
  %569 = vmatprep.subr.mxu0 0.0
  %570 = vmatpush1.msra.mxu0 0.0
  %571 = vmatprep.subr.mxu0 0.0
  %572 = vmatpush1.msra.mxu0 0.0
  %573 = vmatprep.subr.mxu0 0.0
  %574 = vmatpush1.msra.mxu0 0.0
  %575 = vmatprep.mubr.f32.mxu0 0.0
  %576 = vmatmul.mubr.f32.gmra.mrb[0].mxu0 %v509
  %v577 = vpop.f32.mrb[0].mxu0
  %v578 = vadd.f32 %v506, %v577
  %v579 = vpop.f32.mrb[0].mxu0
  %580 = vdwg.mxu0
  %581 = vst [vmem:[%s7] sm:$0x3] %v578
  // Predicated region
  $region30: #{qnetwork_forward.1} parent=0 // pred_check
    _
  $region31: #{qnetwork_forward.1} parent=0 // pred_check_branch
    %583 = sbr.rel (0) target = $region33
  $region32: #{qnetwork_forward.1} parent=0 // pred_region
    _
  $region33: #{qnetwork_forward.1} parent=0 // pred_fallthru
    _
  // Predicated region
  $region34: #{qnetwork_forward.1} parent=0 // pred_check
    _
  $region35: #{qnetwork_forward.1} parent=0 // pred_check_branch
    %585 = sbr.rel (0) target = $region37
  $region36: #{qnetwork_forward.1} parent=0 // pred_region
    _
  $region37: #{qnetwork_forward.1} parent=0 // pred_fallthru
    _

</llo_original>
